<compile_context>
chip_gen: v5e
topology: v5e:2x2
jax: 0.10.0
libtpu: 0.0.40
codegen_flags: <defaults>
</compile_context>

<pallas_src>
import jax
import jax.numpy as jnp
import numpy as np
from jax.experimental import pallas as pl
from jax.experimental.pallas import tpu as pltpu


# ----------------------------------------------------------------------------
# Weight transform: fold nearest-2x upsample into the 3x3 conv weights.
# ----------------------------------------------------------------------------
def _fold_upsample_into_weights(w_hwio):
    """w_hwio: (3, 3, Cin, Cout) -> (9, Cin, 4*Cout), f32.

    conv3x3(pad=1)(upsample2x(x))[2i+a, 2j+b] equals a 3x3 'valid' conv of the
    zero-padded low-res x at (i, j) with kernel E[a, b], where original tap dy
    contributes to padded-row-offset t according to:
        parity a=0:  t=0 <- {dy=0},      t=1 <- {dy=1, dy=2}, t=2 <- {}
        parity a=1:  t=0 <- {},          t=1 <- {dy=0, dy=1}, t=2 <- {dy=2}
    (identically for columns with parity b).  R[a, t, dy] encodes that map.
    """
    R = jnp.array(
        [[[1.0, 0.0, 0.0],
          [0.0, 1.0, 1.0],
          [0.0, 0.0, 0.0]],
         [[0.0, 0.0, 0.0],
          [1.0, 1.0, 0.0],
          [0.0, 0.0, 1.0]]], dtype=jnp.float32)            # R[a, t, dy]
    # e[t, u, cin, a, b, cout] = sum_{dy,dx} R[a,t,dy] R[b,u,dx] w[dy,dx,cin,cout]
    e = jnp.einsum("atd,bue,deio->tuiabo", R, R, w_hwio)
    cin, cout = w_hwio.shape[2], w_hwio.shape[3]
    # rows: tap k = t*3 + u ; cols: parity-major channel (a*2 + b)*Cout + cout
    return e.reshape(9, cin, 4 * cout)


# ----------------------------------------------------------------------------
# Fused Pallas kernel: conv (upsample folded in) + BatchNorm(batch stats) + ReLU
# ----------------------------------------------------------------------------
def up_conv_kernel(lhs_ref, w_ref, g_ref, b_ref, o_ref):
    """lhs_ref : (M, Kp)       bf16  im2col of zero-padded low-res input (K padded)
       w_ref   : (Kp, 4*Cout)  bf16  upsample-folded, parity-expanded weights
       g_ref   : (1, 4*Cout)   f32   BN gamma, tiled over the 4 parities
       b_ref   : (1, 4*Cout)   f32   BN beta,  tiled over the 4 parities
       o_ref   : (M, 4*Cout)   f32   rows = (n, i, j); cols = parity-major channels
    """
    M = o_ref.shape[0]
    Cout = o_ref.shape[1] // 4

    # Single fused MXU pass: bf16 operands, f32 accumulation.  Conv bias omitted:
    # it is exactly cancelled by the batch-statistics mean subtraction below.
    y = jnp.dot(lhs_ref[...], w_ref[...],
                preferred_element_type=jnp.float32)        # (M, 4*Cout) f32

    # BatchNorm statistics (training mode, biased variance): per output channel
    # over every output position = all M rows and all 4 parity column blocks.
    s = jnp.sum(y, axis=0, keepdims=True)                  # (1, 4*Cout)
    sq = jnp.sum(y * y, axis=0, keepdims=True)             # (1, 4*Cout)
    # Parity combine via lane rotations (XLU slot): after the two rolls every lane
    # p*Cout + c holds the total over all 4 parity blocks of channel c, so the
    # stats are already replicated to the full 128-lane width.
    s = s + pltpu.roll(s, shift=2 * Cout, axis=1)
    s = s + pltpu.roll(s, shift=Cout, axis=1)
    sq = sq + pltpu.roll(sq, shift=2 * Cout, axis=1)
    sq = sq + pltpu.roll(sq, shift=Cout, axis=1)

    count = jnp.float32(M * 4)                             # N * 2H * 2W
    mean = s / count
    var = jnp.maximum(sq / count - mean * mean, 0.0)
    inv = jax.lax.rsqrt(var + jnp.float32(1e-5))
    scale = g_ref[...] * inv                               # (1, 4*Cout)
    shift = b_ref[...] - mean * scale                      # (1, 4*Cout)

    # Affine + ReLU, one unmasked full-128-lane store.
    o_ref[...] = jnp.maximum(y * scale + shift, 0.0)


# ----------------------------------------------------------------------------
# Wrapper
# ----------------------------------------------------------------------------
def up_conv_pallas(x_nchw, w_oihw, gamma, beta):
    """PyTorch-convention up_conv forward: x NCHW -> NCHW (N, Cout, 2H, 2W)."""
    N, Cin, H, W = x_nchw.shape
    Cout = w_oihw.shape[0]
    M = N * H * W
    K = 9 * Cin
    Kp = ((K + 15) // 16) * 16          # pad K for dense bf16 sublane packing

    # NCHW -> NHWC; zero-pad the LOW-RES input by 1 (the 3x3/pad=1 conv of the
    # 2x-upsampled image == four 3x3 'valid' parity convs of this padded input).
    x = jnp.transpose(x_nchw, (0, 2, 3, 1)).astype(jnp.float32)
    xp = jnp.pad(x, ((0, 0), (1, 1), (1, 1), (0, 0)))

    # im2col on the XLA side: tap-major columns (t*3+u, then cin), then pad K.
    patches = [xp[:, t:t + H, u:u + W, :] for t in range(3) for u in range(3)]
    lhs = jnp.concatenate(patches, axis=-1).reshape(M, K)
    lhs = jnp.pad(lhs, ((0, 0), (0, Kp - K))).astype(jnp.bfloat16)

    w_hwio = jnp.transpose(w_oihw, (2, 3, 1, 0)).astype(jnp.float32)  # (3,3,Cin,Cout)
    wf = _fold_upsample_into_weights(w_hwio).reshape(K, 4 * Cout)
    wf = jnp.pad(wf, ((0, Kp - K), (0, 0))).astype(jnp.bfloat16)      # (Kp, 4*Cout)

    g4 = jnp.tile(gamma.reshape(1, Cout).astype(jnp.float32), (1, 4))  # (1, 4*Cout)
    b4 = jnp.tile(beta.reshape(1, Cout).astype(jnp.float32), (1, 4))

    out2d = pl.pallas_call(
        up_conv_kernel,
        out_shape=jax.ShapeDtypeStruct((M, 4 * Cout), jnp.float32),
        grid=(1,),
        in_specs=[
            pl.BlockSpec((M, Kp), lambda i: (0, 0)),
            pl.BlockSpec((Kp, 4 * Cout), lambda i: (0, 0)),
            pl.BlockSpec((1, 4 * Cout), lambda i: (0, 0)),
            pl.BlockSpec((1, 4 * Cout), lambda i: (0, 0)),
        ],
        out_specs=pl.BlockSpec((M, 4 * Cout), lambda i: (0, 0)),
        compiler_params=pltpu.CompilerParams(
            dimension_semantics=("arbitrary",),
            vmem_limit_bytes=32 * 1024 * 1024,
        ),
    )(lhs, wf, g4, b4)

    # Parity de-interleave + NHWC->NCHW in one XLA transpose (needed anyway).
    out = out2d.reshape(N, H, W, 2, 2, Cout)                 # (n, i, j, a, b, c)
    out = jnp.transpose(out, (0, 5, 1, 3, 2, 4))             # (n, c, i, a, j, b)
    return out.reshape(N, Cout, 2 * H, 2 * W)


# ----------------------------------------------------------------------------
# Pure-JAX reference (mirrors the PyTorch module exactly, f32, conv bias incl.)
# ----------------------------------------------------------------------------
def up_conv_reference(x_nchw, w_oihw, bias, gamma, beta, eps=1e-5):
    x = jnp.repeat(jnp.repeat(x_nchw, 2, axis=2), 2, axis=3)   # nearest upsample
    y = jax.lax.conv_general_dilated(
        x, w_oihw, window_strides=(1, 1), padding=((1, 1), (1, 1)),
        dimension_numbers=("NCHW", "OIHW", "NCHW"),
        precision=jax.lax.Precision.HIGHEST)
    y = y + bias[None, :, None, None]
    mean = jnp.mean(y, axis=(0, 2, 3), keepdims=True)
    var = jnp.mean((y - mean) ** 2, axis=(0, 2, 3), keepdims=True)   # biased
    y = (y - mean) * jax.lax.rsqrt(var + eps)
    y = y * gamma[None, :, None, None] + beta[None, :, None, None]
    return jnp.maximum(y, 0.0)


# ----------------------------------------------------------------------------
if __name__ == "__main__":
    key = jax.random.PRNGKey(0)
    k_x, k_w, k_b, k_g, k_be = jax.random.split(key, 5)

    # Small shapes consistent with the module: batch=2, in_ch=4, 16x16 spatial.
    # out_ch=32 so the kernel's 4*Cout output slab is exactly 128 lanes.
    N, Cin, H, W = 2, 4, 16, 16
    Cout = 32

    x = jax.random.normal(k_x, (N, Cin, H, W), jnp.float32)
    bound = 1.0 / np.sqrt(Cin * 9)
    w = jax.random.uniform(k_w, (Cout, Cin, 3, 3), jnp.float32, -bound, bound)
    bias = jax.random.uniform(k_b, (Cout,), jnp.float32, -bound, bound)
    gamma = jax.random.uniform(k_g, (Cout,), jnp.float32, 0.5, 1.5)
    beta = 0.1 * jax.random.normal(k_be, (Cout,), jnp.float32)

    fwd = jax.jit(up_conv_pallas)
    out = fwd(x, w, gamma, beta)          # bias not passed: cancelled exactly by BN
    jax.block_until_ready(out)

    ref = up_conv_reference(x, w, bias, gamma, beta)
    assert out.shape == (N, Cout, 2 * H, 2 * W)
    assert bool(jnp.all(jnp.isfinite(out)))
    # Tolerance accounts for the deliberate bf16 quantization of the matmul
    # operands (accumulation and all BN math stay f32); structural error is ~1e-6.
    max_err = float(jnp.max(jnp.abs(out - ref)))
    assert max_err < 3e-2, f"mismatch vs reference: max abs err = {max_err}"
    print("KERNEL_OK")
</pallas_src>

<mosaic_0001>
module attributes {stable_mosaic.version = 11 : i64} {
  func.func @up_conv_kernel(%arg0: i32, %arg1: memref<512x48xbf16, #tpu.memory_space<vmem>>, %arg2: memref<48x128xbf16, #tpu.memory_space<vmem>>, %arg3: memref<1x128xf32, #tpu.memory_space<vmem>>, %arg4: memref<1x128xf32, #tpu.memory_space<vmem>>, %arg5: memref<512x128xf32, #tpu.memory_space<vmem>>) attributes {dimension_semantics = [#tpu.dimension_semantics<arbitrary>], iteration_bounds = array<i64: 1>, scalar_prefetch = 0 : i64, scratch_operands = 0 : i64, tpu.core_type = #tpu.core_type<tc>, window_params = [{pipeline_mode = #tpu.pipeline_mode<synchronous>, transform_indices = @transform_0, window_bounds = array<i64: 512, 48>}, {pipeline_mode = #tpu.pipeline_mode<synchronous>, transform_indices = @transform_1, window_bounds = array<i64: 48, 128>}, {pipeline_mode = #tpu.pipeline_mode<synchronous>, transform_indices = @transform_2, window_bounds = array<i64: 1, 128>}, {pipeline_mode = #tpu.pipeline_mode<synchronous>, transform_indices = @transform_3, window_bounds = array<i64: 1, 128>}, {pipeline_mode = #tpu.pipeline_mode<synchronous>, transform_indices = @transform_4, window_bounds = array<i64: 512, 128>}]} {
    %c0 = arith.constant 0 : index
    %c0_0 = arith.constant 0 : index
    %0 = vector.load %arg1[%c0, %c0_0] : memref<512x48xbf16, #tpu.memory_space<vmem>>, vector<512x48xbf16>
    %c0_1 = arith.constant 0 : index
    %c0_2 = arith.constant 0 : index
    %1 = vector.load %arg2[%c0_1, %c0_2] : memref<48x128xbf16, #tpu.memory_space<vmem>>, vector<48x128xbf16>
    %cst = arith.constant dense<0.000000e+00> : vector<512x128xf32>
    %2 = tpu.matmul %0, %1, %cst {dimension_numbers = #tpu.dot_dimension_numbers<[1], [0], [0], [1], [0, 0, 1, 1], [], []>} : vector<512x48xbf16>, vector<48x128xbf16>, vector<512x128xf32> -> vector<512x128xf32>
    %cst_3 = arith.constant dense<0.000000e+00> : vector<128xf32>
    %3 = vector.multi_reduction <add>, %2, %cst_3 [0] : vector<512x128xf32> to vector<128xf32>
    %4 = vector.shape_cast %3 : vector<128xf32> to vector<1x128xf32>
    %5 = arith.mulf %2, %2 : vector<512x128xf32>
    %cst_4 = arith.constant dense<0.000000e+00> : vector<128xf32>
    %6 = vector.multi_reduction <add>, %5, %cst_4 [0] : vector<512x128xf32> to vector<128xf32>
    %7 = vector.shape_cast %6 : vector<128xf32> to vector<1x128xf32>
    %c64_i32 = arith.constant 64 : i32
    %8 = tpu.dynamic_rotate %4 by %c64_i32 dim 1 : vector<1x128xf32>, i32 -> vector<1x128xf32>
    %9 = arith.addf %4, %8 : vector<1x128xf32>
    %c32_i32 = arith.constant 32 : i32
    %10 = tpu.dynamic_rotate %9 by %c32_i32 dim 1 : vector<1x128xf32>, i32 -> vector<1x128xf32>
    %11 = arith.addf %9, %10 : vector<1x128xf32>
    %c64_i32_5 = arith.constant 64 : i32
    %12 = tpu.dynamic_rotate %7 by %c64_i32_5 dim 1 : vector<1x128xf32>, i32 -> vector<1x128xf32>
    %13 = arith.addf %7, %12 : vector<1x128xf32>
    %c32_i32_6 = arith.constant 32 : i32
    %14 = tpu.dynamic_rotate %13 by %c32_i32_6 dim 1 : vector<1x128xf32>, i32 -> vector<1x128xf32>
    %15 = arith.addf %13, %14 : vector<1x128xf32>
    %cst_7 = arith.constant 2.048000e+03 : f32
    %16 = vector.broadcast %cst_7 : f32 to vector<1x128xf32>
    %17 = arith.divf %11, %16 : vector<1x128xf32>
    %cst_8 = arith.constant 2.048000e+03 : f32
    %18 = vector.broadcast %cst_8 : f32 to vector<1x128xf32>
    %19 = arith.divf %15, %18 : vector<1x128xf32>
    %20 = arith.mulf %17, %17 : vector<1x128xf32>
    %21 = arith.subf %19, %20 : vector<1x128xf32>
    %cst_9 = arith.constant 0.000000e+00 : f32
    %22 = vector.broadcast %cst_9 : f32 to vector<1x128xf32>
    %23 = arith.maximumf %21, %22 : vector<1x128xf32>
    %cst_10 = arith.constant 9.99999974E-6 : f32
    %24 = vector.broadcast %cst_10 : f32 to vector<1x128xf32>
    %25 = arith.addf %23, %24 : vector<1x128xf32>
    %26 = math.rsqrt %25 : vector<1x128xf32>
    %c0_11 = arith.constant 0 : index
    %c0_12 = arith.constant 0 : index
    %27 = vector.load %arg3[%c0_11, %c0_12] : memref<1x128xf32, #tpu.memory_space<vmem>>, vector<1x128xf32>
    %28 = arith.mulf %27, %26 : vector<1x128xf32>
    %c0_13 = arith.constant 0 : index
    %c0_14 = arith.constant 0 : index
    %29 = vector.load %arg4[%c0_13, %c0_14] : memref<1x128xf32, #tpu.memory_space<vmem>>, vector<1x128xf32>
    %30 = arith.mulf %17, %28 : vector<1x128xf32>
    %31 = arith.subf %29, %30 : vector<1x128xf32>
    %32 = vector.broadcast %28 : vector<1x128xf32> to vector<512x128xf32>
    %33 = arith.mulf %2, %32 : vector<512x128xf32>
    %34 = vector.broadcast %31 : vector<1x128xf32> to vector<512x128xf32>
    %35 = arith.addf %33, %34 : vector<512x128xf32>
    %cst_15 = arith.constant 0.000000e+00 : f32
    %36 = vector.broadcast %cst_15 : f32 to vector<512x128xf32>
    %37 = arith.maximumf %35, %36 : vector<512x128xf32>
    %c0_16 = arith.constant 0 : index
    %c0_17 = arith.constant 0 : index
    %38 = vector.load %arg5[%c0_16, %c0_17] : memref<512x128xf32, #tpu.memory_space<vmem>>, vector<512x128xf32>
    tpu.vector_store %arg5[%c0_16, %c0_17], %37 {strides = array<i32>} : memref<512x128xf32, #tpu.memory_space<vmem>>, vector<512x128xf32>,
    return
  }
  func.func @transform_0(%arg0: i32) -> (i32, i32) {
    %c0_i32 = arith.constant 0 : i32
    %c0_i32_0 = arith.constant 0 : i32
    %c0_i32_1 = arith.constant 0 : i32
    return %c0_i32, %c0_i32_0 : i32, i32
  }
  func.func @transform_1(%arg0: i32) -> (i32, i32) {
    %c0_i32 = arith.constant 0 : i32
    %c0_i32_0 = arith.constant 0 : i32
    %c0_i32_1 = arith.constant 0 : i32
    return %c0_i32, %c0_i32_0 : i32, i32
  }
  func.func @transform_2(%arg0: i32) -> (i32, i32) {
    %c0_i32 = arith.constant 0 : i32
    %c0_i32_0 = arith.constant 0 : i32
    %c0_i32_1 = arith.constant 0 : i32
    return %c0_i32, %c0_i32_0 : i32, i32
  }
  func.func @transform_3(%arg0: i32) -> (i32, i32) {
    %c0_i32 = arith.constant 0 : i32
    %c0_i32_0 = arith.constant 0 : i32
    %c0_i32_1 = arith.constant 0 : i32
    return %c0_i32, %c0_i32_0 : i32, i32
  }
  func.func @transform_4(%arg0: i32) -> (i32, i32) {
    %c0_i32 = arith.constant 0 : i32
    %c0_i32_0 = arith.constant 0 : i32
    %c0_i32_1 = arith.constant 0 : i32
    return %c0_i32, %c0_i32_0 : i32, i32
  }
}

</mosaic_0001>

<llo_original>
// kernel: up_conv_pallas.1
$region0: #{up_conv_pallas.1}
  #allocation0 [shape = 'u32[]', space=smem, size = 0x4, offset = 0x4, fixed_abs, tag = 'smem constant byte address 0x4 - core index']
  #allocation1 [shape = 'u32[72,128]{1,0:T(1,128)}', space=vmem, size = 0x9000, scoped, tag = 'internal scratch']
  %s0 = inlined_call_operand.vmem [shape: bf16[512,48], index: 0, kind: input, shape index: {}]
  %s1 = inlined_call_operand.vmem [shape: bf16[48,128], index: 1, kind: input, shape index: {}]
  %s2 = inlined_call_operand.vmem [shape: f32[1,128], index: 2, kind: input, shape index: {}]
  %s3 = inlined_call_operand.vmem [shape: f32[1,128], index: 3, kind: input, shape index: {}]
  %s4 = inlined_call_operand.vmem [shape: f32[512,128], index: 4, kind: output, shape index: {}]
  %s5 = sld [smem:[#allocation0]]
  $region26: #{up_conv_pallas.1} parent=0
    _
  %s7 = ssub.s32 1, %s5
  %s8 = scalar_select 0, %s7, %s5
  // Predicated region
  $region2: #{up_conv_pallas.1} parent=0 // pred_check
    _
  $region3: #{up_conv_pallas.1} parent=0 // pred_check_branch
    %10 = sbr.rel (0) target = $region5
  $region4: #{up_conv_pallas.1} parent=0 // pred_region
    _
  $region5: #{up_conv_pallas.1} parent=0 // pred_fallthru
    _
  // Predicated region
  $region6: #{up_conv_pallas.1} parent=0 // pred_check
    _
  $region7: #{up_conv_pallas.1} parent=0 // pred_check_branch
    %12 = sbr.rel (0) target = $region9
  $region8: #{up_conv_pallas.1} parent=0 // pred_region
    _
  $region9: #{up_conv_pallas.1} parent=0 // pred_fallthru
    _
  // Predicated region
  $region10: #{up_conv_pallas.1} parent=0 // pred_check
    _
  $region11: #{up_conv_pallas.1} parent=0 // pred_check_branch
    %14 = sbr.rel (0) target = $region13
  $region12: #{up_conv_pallas.1} parent=0 // pred_region
    _
  $region13: #{up_conv_pallas.1} parent=0 // pred_fallthru
    _
  // Predicated region
  $region14: #{up_conv_pallas.1} parent=0 // pred_check
    _
  $region15: #{up_conv_pallas.1} parent=0 // pred_check_branch
    %16 = sbr.rel (0) target = $region17
  $region16: #{up_conv_pallas.1} parent=0 // pred_region
    _
  $region17: #{up_conv_pallas.1} parent=0 // pred_fallthru
    _
  %v18 = vld [vmem:[%s0] sm:$0xf]
  %v19 = vld [vmem:[%s0 + $0x4] sm:$0xf]
  %v20 = vld [vmem:[%s0 + $0x8] sm:$0xf]
  %v21 = vld [vmem:[%s0 + $0xc] sm:$0xf]
  %v22 = vld [vmem:[%s0 + $0x10] sm:$0xf]
  %v23 = vld [vmem:[%s0 + $0x14] sm:$0xf]
  %v24 = vld [vmem:[%s0 + $0x18] sm:$0xf]
  %v25 = vld [vmem:[%s0 + $0x1c] sm:$0xf]
  %v26 = vld [vmem:[%s0 + $0x20] sm:$0xf]
  %v27 = vld [vmem:[%s0 + $0x24] sm:$0xf]
  %v28 = vld [vmem:[%s0 + $0x28] sm:$0xf]
  %v29 = vld [vmem:[%s0 + $0x2c] sm:$0xf]
  %v30 = vld [vmem:[%s0 + $0x30] sm:$0xf]
  %v31 = vld [vmem:[%s0 + $0x34] sm:$0xf]
  %v32 = vld [vmem:[%s0 + $0x38] sm:$0xf]
  %v33 = vld [vmem:[%s0 + $0x3c] sm:$0xf]
  %v34 = vld [vmem:[%s0 + $0x40] sm:$0xf]
  %v35 = vld [vmem:[%s0 + $0x44] sm:$0xf]
  %v36 = vld [vmem:[%s0 + $0x48] sm:$0xf]
  %v37 = vld [vmem:[%s0 + $0x4c] sm:$0xf]
  %v38 = vld [vmem:[%s0 + $0x50] sm:$0xf]
  %v39 = vld [vmem:[%s0 + $0x54] sm:$0xf]
  %v40 = vld [vmem:[%s0 + $0x58] sm:$0xf]
  %v41 = vld [vmem:[%s0 + $0x5c] sm:$0xf]
  %v42 = vld [vmem:[%s0 + $0x60] sm:$0xf]
  %v43 = vld [vmem:[%s0 + $0x64] sm:$0xf]
  %v44 = vld [vmem:[%s0 + $0x68] sm:$0xf]
  %v45 = vld [vmem:[%s0 + $0x6c] sm:$0xf]
  %v46 = vld [vmem:[%s0 + $0x70] sm:$0xf]
  %v47 = vld [vmem:[%s0 + $0x74] sm:$0xf]
  %v48 = vld [vmem:[%s0 + $0x78] sm:$0xf]
  %v49 = vld [vmem:[%s0 + $0x7c] sm:$0xf]
  %v50 = vld [vmem:[%s0 + $0x80] sm:$0xf]
  %v51 = vld [vmem:[%s0 + $0x84] sm:$0xf]
  %v52 = vld [vmem:[%s0 + $0x88] sm:$0xf]
  %v53 = vld [vmem:[%s0 + $0x8c] sm:$0xf]
  %v54 = vld [vmem:[%s0 + $0x90] sm:$0xf]
  %v55 = vld [vmem:[%s0 + $0x94] sm:$0xf]
  %v56 = vld [vmem:[%s0 + $0x98] sm:$0xf]
  %v57 = vld [vmem:[%s0 + $0x9c] sm:$0xf]
  %v58 = vld [vmem:[%s0 + $0xa0] sm:$0xf]
  %v59 = vld [vmem:[%s0 + $0xa4] sm:$0xf]
  %v60 = vld [vmem:[%s0 + $0xa8] sm:$0xf]
  %v61 = vld [vmem:[%s0 + $0xac] sm:$0xf]
  %v62 = vld [vmem:[%s0 + $0xb0] sm:$0xf]
  %v63 = vld [vmem:[%s0 + $0xb4] sm:$0xf]
  %v64 = vld [vmem:[%s0 + $0xb8] sm:$0xf]
  %v65 = vld [vmem:[%s0 + $0xbc] sm:$0xf]
  %v66 = vld [vmem:[%s0 + $0xc0] sm:$0xf]
  %v67 = vld [vmem:[%s0 + $0xc4] sm:$0xf]
  %v68 = vld [vmem:[%s0 + $0xc8] sm:$0xf]
  %v69 = vld [vmem:[%s0 + $0xcc] sm:$0xf]
  %v70 = vld [vmem:[%s0 + $0xd0] sm:$0xf]
  %v71 = vld [vmem:[%s0 + $0xd4] sm:$0xf]
  %v72 = vld [vmem:[%s0 + $0xd8] sm:$0xf]
  %v73 = vld [vmem:[%s0 + $0xdc] sm:$0xf]
  %v74 = vld [vmem:[%s0 + $0xe0] sm:$0xf]
  %v75 = vld [vmem:[%s0 + $0xe4] sm:$0xf]
  %v76 = vld [vmem:[%s0 + $0xe8] sm:$0xf]
  %v77 = vld [vmem:[%s0 + $0xec] sm:$0xf]
  %v78 = vld [vmem:[%s0 + $0xf0] sm:$0xf]
  %v79 = vld [vmem:[%s0 + $0xf4] sm:$0xf]
  %v80 = vld [vmem:[%s0 + $0xf8] sm:$0xf]
  %v81 = vld [vmem:[%s0 + $0xfc] sm:$0xf]
  %v82 = vld [vmem:[%s1] sm:$0xf]
  %v83 = vld [vmem:[%s1 + $0x4] sm:$0xf]
  %v84 = vld [vmem:[%s1 + $0x8] sm:$0xf]
  %v85 = vld [vmem:[%s1 + $0xc] sm:$0xf]
  %v86 = vld [vmem:[%s1 + $0x10] sm:$0xf]
  %v87 = vld [vmem:[%s1 + $0x14] sm:$0xf]
  %v152 = vunpack.c.l.b16 %v18
  %v153 = vunpack.c.l.b16 %v19
  %v154 = vunpack.c.l.b16 %v20
  %v155 = vunpack.c.l.b16 %v21
  %v156 = vunpack.c.l.b16 %v22
  %v157 = vunpack.c.l.b16 %v23
  %v158 = vunpack.c.l.b16 %v24
  %v159 = vunpack.c.l.b16 %v25
  %v160 = vunpack.c.l.b16 %v26
  %v161 = vunpack.c.l.b16 %v27
  %v162 = vunpack.c.l.b16 %v28
  %v163 = vunpack.c.l.b16 %v29
  %v164 = vunpack.c.l.b16 %v30
  %v165 = vunpack.c.l.b16 %v31
  %v166 = vunpack.c.l.b16 %v32
  %v167 = vunpack.c.l.b16 %v33
  %v168 = vunpack.c.l.b16 %v34
  %v169 = vunpack.c.l.b16 %v35
  %v170 = vunpack.c.l.b16 %v36
  %v171 = vunpack.c.l.b16 %v37
  %v172 = vunpack.c.l.b16 %v38
  %v173 = vunpack.c.l.b16 %v39
  %v174 = vunpack.c.l.b16 %v40
  %v175 = vunpack.c.l.b16 %v41
  %v176 = vunpack.c.l.b16 %v42
  %v177 = vunpack.c.l.b16 %v43
  %v178 = vunpack.c.l.b16 %v44
  %v179 = vunpack.c.l.b16 %v45
  %v180 = vunpack.c.l.b16 %v46
  %v181 = vunpack.c.l.b16 %v47
  %v182 = vunpack.c.l.b16 %v48
  %v183 = vunpack.c.l.b16 %v49
  %v184 = vunpack.c.l.b16 %v50
  %v185 = vunpack.c.l.b16 %v51
  %v186 = vunpack.c.l.b16 %v52
  %v187 = vunpack.c.l.b16 %v53
  %v188 = vunpack.c.l.b16 %v54
  %v189 = vunpack.c.l.b16 %v55
  %v190 = vunpack.c.l.b16 %v56
  %v191 = vunpack.c.l.b16 %v57
  %v192 = vunpack.c.l.b16 %v58
  %v193 = vunpack.c.l.b16 %v59
  %v194 = vunpack.c.l.b16 %v60
  %v195 = vunpack.c.l.b16 %v61
  %v196 = vunpack.c.l.b16 %v62
  %v197 = vunpack.c.l.b16 %v63
  %v198 = vunpack.c.l.b16 %v64
  %v199 = vunpack.c.l.b16 %v65
  %v200 = vunpack.c.l.b16 %v66
  %v201 = vunpack.c.l.b16 %v67
  %v202 = vunpack.c.l.b16 %v68
  %v203 = vunpack.c.l.b16 %v69
  %v204 = vunpack.c.l.b16 %v70
  %v205 = vunpack.c.l.b16 %v71
  %v206 = vunpack.c.l.b16 %v72
  %v207 = vunpack.c.l.b16 %v73
  %v208 = vunpack.c.l.b16 %v74
  %v209 = vunpack.c.l.b16 %v75
  %v210 = vunpack.c.l.b16 %v76
  %v211 = vunpack.c.l.b16 %v77
  %v212 = vunpack.c.l.b16 %v78
  %v213 = vunpack.c.l.b16 %v79
  %v214 = vunpack.c.l.b16 %v80
  %v215 = vunpack.c.l.b16 %v81
  %v216 = vpack.c.b16 %v153, %v152
  %v217 = vpack.c.b16 %v155, %v154
  %v218 = vpack.c.b16 %v157, %v156
  %v219 = vpack.c.b16 %v159, %v158
  %v220 = vpack.c.b16 %v161, %v160
  %v221 = vpack.c.b16 %v163, %v162
  %v222 = vpack.c.b16 %v165, %v164
  %v223 = vpack.c.b16 %v167, %v166
  %v224 = vpack.c.b16 %v169, %v168
  %v225 = vpack.c.b16 %v171, %v170
  %v226 = vpack.c.b16 %v173, %v172
  %v227 = vpack.c.b16 %v175, %v174
  %v228 = vpack.c.b16 %v177, %v176
  %v229 = vpack.c.b16 %v179, %v178
  %v230 = vpack.c.b16 %v181, %v180
  %v231 = vpack.c.b16 %v183, %v182
  %v232 = vpack.c.b16 %v185, %v184
  %v233 = vpack.c.b16 %v187, %v186
  %v234 = vpack.c.b16 %v189, %v188
  %v235 = vpack.c.b16 %v191, %v190
  %v236 = vpack.c.b16 %v193, %v192
  %v237 = vpack.c.b16 %v195, %v194
  %v238 = vpack.c.b16 %v197, %v196
  %v239 = vpack.c.b16 %v199, %v198
  %v240 = vpack.c.b16 %v201, %v200
  %v241 = vpack.c.b16 %v203, %v202
  %v242 = vpack.c.b16 %v205, %v204
  %v243 = vpack.c.b16 %v207, %v206
  %v244 = vpack.c.b16 %v209, %v208
  %v245 = vpack.c.b16 %v211, %v210
  %v246 = vpack.c.b16 %v213, %v212
  %v247 = vpack.c.b16 %v215, %v214
  %v254 = vunpack.c.l.b16 %v82
  %v255 = vunpack.c.l.b16 %v83
  %v256 = vunpack.c.l.b16 %v84
  %v257 = vunpack.c.l.b16 %v85
  %v258 = vunpack.c.l.b16 %v86
  %v259 = vunpack.c.l.b16 %v87
  %v260 = vpack.c.b16 %v255, %v254
  %v261 = vpack.c.b16 %v257, %v256
  %v262 = vpack.c.b16 %v259, %v258
  %vm266 = vcmask 392192
  %v268 = vsel %vm266, %v216, 0
  %v271 = vsel %vm266, %v217, 0
  %v274 = vsel %vm266, %v218, 0
  %v277 = vsel %vm266, %v219, 0
  %v280 = vsel %vm266, %v220, 0
  %v283 = vsel %vm266, %v221, 0
  %v286 = vsel %vm266, %v222, 0
  %v289 = vsel %vm266, %v223, 0
  %v292 = vsel %vm266, %v224, 0
  %v295 = vsel %vm266, %v225, 0
  %v298 = vsel %vm266, %v226, 0
  %v301 = vsel %vm266, %v227, 0
  %v304 = vsel %vm266, %v228, 0
  %v307 = vsel %vm266, %v229, 0
  %v310 = vsel %vm266, %v230, 0
  %v313 = vsel %vm266, %v231, 0
  %v316 = vsel %vm266, %v232, 0
  %v319 = vsel %vm266, %v233, 0
  %v322 = vsel %vm266, %v234, 0
  %v325 = vsel %vm266, %v235, 0
  %v328 = vsel %vm266, %v236, 0
  %v331 = vsel %vm266, %v237, 0
  %v334 = vsel %vm266, %v238, 0
  %v337 = vsel %vm266, %v239, 0
  %v340 = vsel %vm266, %v240, 0
  %v343 = vsel %vm266, %v241, 0
  %v346 = vsel %vm266, %v242, 0
  %v349 = vsel %vm266, %v243, 0
  %v352 = vsel %vm266, %v244, 0
  %v355 = vsel %vm266, %v245, 0
  %v358 = vsel %vm266, %v246, 0
  %v361 = vsel %vm266, %v247, 0
  %363 = vmatpush.bf16.msra.mxu0 0
  %364 = vmatpush.bf16.msra.mxu0 0
  %365 = vmatpush.bf16.msra.mxu0 0
  %366 = vmatpush.bf16.msra.mxu0 0
  %367 = vmatpush.bf16.msra.mxu0 0
  %368 = vmatpush.bf16.msra.mxu0 %v262
  %369 = vmatpush.bf16.msra.mxu0 %v261
  %370 = vmatpush.bf16.msra.mxu0 %v260
  %371 = vmatmul.bf16.gmra.mxu0 %v268
  %v372 = vpop.f32.mrf.mxu0
  %v373 = vadd.f32 0.0, %v372
  %v374 = vpop.f32.mrf.mxu0
  %v375 = vadd.f32 0.0, %v374
  %376 = vmatmul.bf16.gmra.mxu0 %v271
  %v377 = vpop.f32.mrf.mxu0
  %v378 = vadd.f32 0.0, %v377
  %v379 = vpop.f32.mrf.mxu0
  %v380 = vadd.f32 0.0, %v379
  %381 = vmatmul.bf16.gmra.mxu0 %v274
  %v382 = vpop.f32.mrf.mxu0
  %v383 = vadd.f32 0.0, %v382
  %v384 = vpop.f32.mrf.mxu0
  %v385 = vadd.f32 0.0, %v384
  %386 = vmatmul.bf16.gmra.mxu0 %v277
  %v387 = vpop.f32.mrf.mxu0
  %v388 = vadd.f32 0.0, %v387
  %v389 = vpop.f32.mrf.mxu0
  %v390 = vadd.f32 0.0, %v389
  %391 = vmatmul.bf16.gmra.mxu0 %v280
  %v392 = vpop.f32.mrf.mxu0
  %v393 = vadd.f32 0.0, %v392
  %v394 = vpop.f32.mrf.mxu0
  %v395 = vadd.f32 0.0, %v394
  %396 = vmatmul.bf16.gmra.mxu0 %v283
  %v397 = vpop.f32.mrf.mxu0
  %v398 = vadd.f32 0.0, %v397
  %v399 = vpop.f32.mrf.mxu0
  %v400 = vadd.f32 0.0, %v399
  %401 = vmatmul.bf16.gmra.mxu0 %v286
  %v402 = vpop.f32.mrf.mxu0
  %v403 = vadd.f32 0.0, %v402
  %v404 = vpop.f32.mrf.mxu0
  %v405 = vadd.f32 0.0, %v404
  %406 = vmatmul.bf16.gmra.mxu0 %v289
  %v407 = vpop.f32.mrf.mxu0
  %v408 = vadd.f32 0.0, %v407
  %v409 = vpop.f32.mrf.mxu0
  %v410 = vadd.f32 0.0, %v409
  %411 = vmatmul.bf16.gmra.mxu0 %v292
  %v412 = vpop.f32.mrf.mxu0
  %v413 = vadd.f32 0.0, %v412
  %v414 = vpop.f32.mrf.mxu0
  %v415 = vadd.f32 0.0, %v414
  %416 = vmatmul.bf16.gmra.mxu0 %v295
  %v417 = vpop.f32.mrf.mxu0
  %v418 = vadd.f32 0.0, %v417
  %v419 = vpop.f32.mrf.mxu0
  %v420 = vadd.f32 0.0, %v419
  %421 = vmatmul.bf16.gmra.mxu0 %v298
  %v422 = vpop.f32.mrf.mxu0
  %v423 = vadd.f32 0.0, %v422
  %v424 = vpop.f32.mrf.mxu0
  %v425 = vadd.f32 0.0, %v424
  %426 = vmatmul.bf16.gmra.mxu0 %v301
  %v427 = vpop.f32.mrf.mxu0
  %v428 = vadd.f32 0.0, %v427
  %v429 = vpop.f32.mrf.mxu0
  %v430 = vadd.f32 0.0, %v429
  %431 = vmatmul.bf16.gmra.mxu0 %v304
  %v432 = vpop.f32.mrf.mxu0
  %v433 = vadd.f32 0.0, %v432
  %v434 = vpop.f32.mrf.mxu0
  %v435 = vadd.f32 0.0, %v434
  %436 = vmatmul.bf16.gmra.mxu0 %v307
  %v437 = vpop.f32.mrf.mxu0
  %v438 = vadd.f32 0.0, %v437
  %v439 = vpop.f32.mrf.mxu0
  %v440 = vadd.f32 0.0, %v439
  %441 = vmatmul.bf16.gmra.mxu0 %v310
  %v442 = vpop.f32.mrf.mxu0
  %v443 = vadd.f32 0.0, %v442
  %v444 = vpop.f32.mrf.mxu0
  %v445 = vadd.f32 0.0, %v444
  %446 = vmatmul.bf16.gmra.mxu0 %v313
  %v447 = vpop.f32.mrf.mxu0
  %v448 = vadd.f32 0.0, %v447
  %v449 = vpop.f32.mrf.mxu0
  %v450 = vadd.f32 0.0, %v449
  %451 = vmatmul.bf16.gmra.mxu0 %v316
  %v452 = vpop.f32.mrf.mxu0
  %v453 = vadd.f32 0.0, %v452
  %v454 = vpop.f32.mrf.mxu0
  %v455 = vadd.f32 0.0, %v454
  %456 = vmatmul.bf16.gmra.mxu0 %v319
  %v457 = vpop.f32.mrf.mxu0
  %v458 = vadd.f32 0.0, %v457
  %v459 = vpop.f32.mrf.mxu0
  %v460 = vadd.f32 0.0, %v459
  %461 = vmatmul.bf16.gmra.mxu0 %v322
  %v462 = vpop.f32.mrf.mxu0
  %v463 = vadd.f32 0.0, %v462
  %v464 = vpop.f32.mrf.mxu0
  %v465 = vadd.f32 0.0, %v464
  %466 = vmatmul.bf16.gmra.mxu0 %v325
  %v467 = vpop.f32.mrf.mxu0
  %v468 = vadd.f32 0.0, %v467
  %v469 = vpop.f32.mrf.mxu0
  %v470 = vadd.f32 0.0, %v469
  %471 = vmatmul.bf16.gmra.mxu0 %v328
  %v472 = vpop.f32.mrf.mxu0
  %v473 = vadd.f32 0.0, %v472
  %v474 = vpop.f32.mrf.mxu0
  %v475 = vadd.f32 0.0, %v474
  %476 = vmatmul.bf16.gmra.mxu0 %v331
  %v477 = vpop.f32.mrf.mxu0
  %v478 = vadd.f32 0.0, %v477
  %v479 = vpop.f32.mrf.mxu0
  %v480 = vadd.f32 0.0, %v479
  %481 = vmatmul.bf16.gmra.mxu0 %v334
  %v482 = vpop.f32.mrf.mxu0
  %v483 = vadd.f32 0.0, %v482
  %v484 = vpop.f32.mrf.mxu0
  %v485 = vadd.f32 0.0, %v484
  %486 = vmatmul.bf16.gmra.mxu0 %v337
  %v487 = vpop.f32.mrf.mxu0
  %v488 = vadd.f32 0.0, %v487
  %v489 = vpop.f32.mrf.mxu0
  %v490 = vadd.f32 0.0, %v489
  %491 = vmatmul.bf16.gmra.mxu0 %v340
  %v492 = vpop.f32.mrf.mxu0
  %v493 = vadd.f32 0.0, %v492
  %v494 = vpop.f32.mrf.mxu0
  %v495 = vadd.f32 0.0, %v494
  %496 = vmatmul.bf16.gmra.mxu0 %v343
  %v497 = vpop.f32.mrf.mxu0
  %v498 = vadd.f32 0.0, %v497
  %v499 = vpop.f32.mrf.mxu0
  %v500 = vadd.f32 0.0, %v499
  %501 = vmatmul.bf16.gmra.mxu0 %v346
  %v502 = vpop.f32.mrf.mxu0
  %v503 = vadd.f32 0.0, %v502
  %v504 = vpop.f32.mrf.mxu0
  %v505 = vadd.f32 0.0, %v504
  %506 = vmatmul.bf16.gmra.mxu0 %v349
  %v507 = vpop.f32.mrf.mxu0
  %v508 = vadd.f32 0.0, %v507
  %v509 = vpop.f32.mrf.mxu0
  %v510 = vadd.f32 0.0, %v509
  %511 = vmatmul.bf16.gmra.mxu0 %v352
  %v512 = vpop.f32.mrf.mxu0
  %v513 = vadd.f32 0.0, %v512
  %v514 = vpop.f32.mrf.mxu0
  %v515 = vadd.f32 0.0, %v514
  %516 = vmatmul.bf16.gmra.mxu0 %v355
  %v517 = vpop.f32.mrf.mxu0
  %v518 = vadd.f32 0.0, %v517
  %v519 = vpop.f32.mrf.mxu0
  %v520 = vadd.f32 0.0, %v519
  %521 = vmatmul.bf16.gmra.mxu0 %v358
  %v522 = vpop.f32.mrf.mxu0
  %v523 = vadd.f32 0.0, %v522
  %v524 = vpop.f32.mrf.mxu0
  %v525 = vadd.f32 0.0, %v524
  %526 = vmatmul.bf16.gmra.mxu0 %v361
  %v527 = vpop.f32.mrf.mxu0
  %v528 = vadd.f32 0.0, %v527
  %v529 = vpop.f32.mrf.mxu0
  %v530 = vadd.f32 0.0, %v529
  %531 = vdwg.mxu0
  %v532 = vadd.f32 %v373, %v375
  %v533 = vadd.f32 %v532, %v378
  %v534 = vadd.f32 %v533, %v380
  %v535 = vadd.f32 %v534, %v383
  %v536 = vadd.f32 %v535, %v385
  %v537 = vadd.f32 %v536, %v388
  %v538 = vadd.f32 %v537, %v390
  %v539 = vadd.f32 %v538, %v393
  %v540 = vadd.f32 %v539, %v395
  %v541 = vadd.f32 %v540, %v398
  %v542 = vadd.f32 %v541, %v400
  %v543 = vadd.f32 %v542, %v403
  %v544 = vadd.f32 %v543, %v405
  %v545 = vadd.f32 %v544, %v408
  %v546 = vadd.f32 %v545, %v410
  %v547 = vadd.f32 %v546, %v413
  %v548 = vadd.f32 %v547, %v415
  %v549 = vadd.f32 %v548, %v418
  %v550 = vadd.f32 %v549, %v420
  %v551 = vadd.f32 %v550, %v423
  %v552 = vadd.f32 %v551, %v425
  %v553 = vadd.f32 %v552, %v428
  %v554 = vadd.f32 %v553, %v430
  %v555 = vadd.f32 %v554, %v433
  %v556 = vadd.f32 %v555, %v435
  %v557 = vadd.f32 %v556, %v438
  %v558 = vadd.f32 %v557, %v440
  %v559 = vadd.f32 %v558, %v443
  %v560 = vadd.f32 %v559, %v445
  %v561 = vadd.f32 %v560, %v448
  %v562 = vadd.f32 %v561, %v450
  %v563 = vadd.f32 %v562, %v453
  %v564 = vadd.f32 %v563, %v455
  %v565 = vadd.f32 %v564, %v458
  %v566 = vadd.f32 %v565, %v460
  %v567 = vadd.f32 %v566, %v463
  %v568 = vadd.f32 %v567, %v465
  %v569 = vadd.f32 %v568, %v468
  %v570 = vadd.f32 %v569, %v470
  %v571 = vadd.f32 %v570, %v473
  %v572 = vadd.f32 %v571, %v475
  %v573 = vadd.f32 %v572, %v478
  %v574 = vadd.f32 %v573, %v480
  %v575 = vadd.f32 %v574, %v483
  %v576 = vadd.f32 %v575, %v485
  %v577 = vadd.f32 %v576, %v488
  %v578 = vadd.f32 %v577, %v490
  %v579 = vadd.f32 %v578, %v493
  %v580 = vadd.f32 %v579, %v495
  %v581 = vadd.f32 %v580, %v498
  %v582 = vadd.f32 %v581, %v500
  %v583 = vadd.f32 %v582, %v503
  %v584 = vadd.f32 %v583, %v505
  %v585 = vadd.f32 %v584, %v508
  %v586 = vadd.f32 %v585, %v510
  %v587 = vadd.f32 %v586, %v513
  %v588 = vadd.f32 %v587, %v515
  %v589 = vadd.f32 %v588, %v518
  %v590 = vadd.f32 %v589, %v520
  %v591 = vadd.f32 %v590, %v523
  %v592 = vadd.f32 %v591, %v525
  %v593 = vadd.f32 %v592, %v528
  %v594 = vadd.f32 %v593, %v530
  %v595 = vrot.slane %v594, 4
  %v596 = vadd.f32 %v594, %v595
  %v597 = vrot.slane %v596, 2
  %v598 = vadd.f32 %v596, %v597
  %v599 = vrot.slane %v598, 1
  %v600 = vadd.f32 %v598, %v599
  %v601 = vmul.f32 %v373, %v373
  %v602 = vmul.f32 %v375, %v375
  %v603 = vmul.f32 %v378, %v378
  %v604 = vmul.f32 %v380, %v380
  %v605 = vmul.f32 %v383, %v383
  %v606 = vmul.f32 %v385, %v385
  %v607 = vmul.f32 %v388, %v388
  %v608 = vmul.f32 %v390, %v390
  %v609 = vmul.f32 %v393, %v393
  %v610 = vmul.f32 %v395, %v395
  %v611 = vmul.f32 %v398, %v398
  %v612 = vmul.f32 %v400, %v400
  %v613 = vmul.f32 %v403, %v403
  %v614 = vmul.f32 %v405, %v405
  %v615 = vmul.f32 %v408, %v408
  %v616 = vmul.f32 %v410, %v410
  %v617 = vmul.f32 %v413, %v413
  %v618 = vmul.f32 %v415, %v415
  %v619 = vmul.f32 %v418, %v418
  %v620 = vmul.f32 %v420, %v420
  %v621 = vmul.f32 %v423, %v423
  %v622 = vmul.f32 %v425, %v425
  %v623 = vmul.f32 %v428, %v428
  %v624 = vmul.f32 %v430, %v430
  %v625 = vmul.f32 %v433, %v433
  %v626 = vmul.f32 %v435, %v435
  %v627 = vmul.f32 %v438, %v438
  %v628 = vmul.f32 %v440, %v440
  %v629 = vmul.f32 %v443, %v443
  %v630 = vmul.f32 %v445, %v445
  %v631 = vmul.f32 %v448, %v448
  %v632 = vmul.f32 %v450, %v450
  %v633 = vmul.f32 %v453, %v453
  %v634 = vmul.f32 %v455, %v455
  %v635 = vmul.f32 %v458, %v458
  %v636 = vmul.f32 %v460, %v460
  %v637 = vmul.f32 %v463, %v463
  %v638 = vmul.f32 %v465, %v465
  %v639 = vmul.f32 %v468, %v468
  %v640 = vmul.f32 %v470, %v470
  %v641 = vmul.f32 %v473, %v473
  %v642 = vmul.f32 %v475, %v475
  %v643 = vmul.f32 %v478, %v478
  %v644 = vmul.f32 %v480, %v480
  %v645 = vmul.f32 %v483, %v483
  %v646 = vmul.f32 %v485, %v485
  %v647 = vmul.f32 %v488, %v488
  %v648 = vmul.f32 %v490, %v490
  %v649 = vmul.f32 %v493, %v493
  %v650 = vmul.f32 %v495, %v495
  %v651 = vmul.f32 %v498, %v498
  %v652 = vmul.f32 %v500, %v500
  %v653 = vmul.f32 %v503, %v503
  %v654 = vmul.f32 %v505, %v505
  %v655 = vmul.f32 %v508, %v508
  %v656 = vmul.f32 %v510, %v510
  %v657 = vmul.f32 %v513, %v513
  %v658 = vmul.f32 %v515, %v515
  %v659 = vmul.f32 %v518, %v518
  %v660 = vmul.f32 %v520, %v520
  %v661 = vmul.f32 %v523, %v523
  %v662 = vmul.f32 %v525, %v525
  %v663 = vmul.f32 %v528, %v528
  %v664 = vmul.f32 %v530, %v530
  %v665 = vadd.f32 %v601, %v602
  %v666 = vadd.f32 %v665, %v603
  %v667 = vadd.f32 %v666, %v604
  %v668 = vadd.f32 %v667, %v605
  %v669 = vadd.f32 %v668, %v606
  %v670 = vadd.f32 %v669, %v607
  %v671 = vadd.f32 %v670, %v608
  %v672 = vadd.f32 %v671, %v609
  %v673 = vadd.f32 %v672, %v610
  %v674 = vadd.f32 %v673, %v611
  %v675 = vadd.f32 %v674, %v612
  %v676 = vadd.f32 %v675, %v613
  %v677 = vadd.f32 %v676, %v614
  %v678 = vadd.f32 %v677, %v615
  %v679 = vadd.f32 %v678, %v616
  %v680 = vadd.f32 %v679, %v617
  %v681 = vadd.f32 %v680, %v618
  %v682 = vadd.f32 %v681, %v619
  %v683 = vadd.f32 %v682, %v620
  %v684 = vadd.f32 %v683, %v621
  %v685 = vadd.f32 %v684, %v622
  %v686 = vadd.f32 %v685, %v623
  %v687 = vadd.f32 %v686, %v624
  %v688 = vadd.f32 %v687, %v625
  %v689 = vadd.f32 %v688, %v626
  %v690 = vadd.f32 %v689, %v627
  %v691 = vadd.f32 %v690, %v628
  %v692 = vadd.f32 %v691, %v629
  %v693 = vadd.f32 %v692, %v630
  %v694 = vadd.f32 %v693, %v631
  %v695 = vadd.f32 %v694, %v632
  %v696 = vadd.f32 %v695, %v633
  %v697 = vadd.f32 %v696, %v634
  %v698 = vadd.f32 %v697, %v635
  %v699 = vadd.f32 %v698, %v636
  %v700 = vadd.f32 %v699, %v637
  %v701 = vadd.f32 %v700, %v638
  %v702 = vadd.f32 %v701, %v639
  %v703 = vadd.f32 %v702, %v640
  %v704 = vadd.f32 %v703, %v641
  %v705 = vadd.f32 %v704, %v642
  %v706 = vadd.f32 %v705, %v643
  %v707 = vadd.f32 %v706, %v644
  %v708 = vadd.f32 %v707, %v645
  %v709 = vadd.f32 %v708, %v646
  %v710 = vadd.f32 %v709, %v647
  %v711 = vadd.f32 %v710, %v648
  %v712 = vadd.f32 %v711, %v649
  %v713 = vadd.f32 %v712, %v650
  %v714 = vadd.f32 %v713, %v651
  %v715 = vadd.f32 %v714, %v652
  %v716 = vadd.f32 %v715, %v653
  %v717 = vadd.f32 %v716, %v654
  %v718 = vadd.f32 %v717, %v655
  %v719 = vadd.f32 %v718, %v656
  %v720 = vadd.f32 %v719, %v657
  %v721 = vadd.f32 %v720, %v658
  %v722 = vadd.f32 %v721, %v659
  %v723 = vadd.f32 %v722, %v660
  %v724 = vadd.f32 %v723, %v661
  %v725 = vadd.f32 %v724, %v662
  %v726 = vadd.f32 %v725, %v663
  %v727 = vadd.f32 %v726, %v664
  %v728 = vrot.slane %v727, 4
  %v729 = vadd.f32 %v727, %v728
  %v730 = vrot.slane %v729, 2
  %v731 = vadd.f32 %v729, %v730
  %v732 = vrot.slane %v731, 1
  %v733 = vadd.f32 %v731, %v732
  %734 = vrot.lane.b32.xlu0 %v600, 64
  %v735 = vpop.permute.xlu0 %734
  %v736 = vadd.f32 %v600, %v735
  %737 = vrot.lane.b32.xlu0 %v736, 32
  %v738 = vpop.permute.xlu0 %737
  %v739 = vadd.f32 %v736, %v738
  %740 = vrot.lane.b32.xlu0 %v733, 64
  %v741 = vpop.permute.xlu0 %740
  %v742 = vadd.f32 %v733, %v741
  %743 = vrot.lane.b32.xlu0 %v742, 32
  %v744 = vpop.permute.xlu0 %743
  %v745 = vadd.f32 %v742, %v744
  %v746 = vrcp.pop 2048.0
  %v747 = vmul.f32 2048.0, %v746
  %v748 = vsub.f32 1.0, %v747
  %v749 = vmul.f32 %v746, %v748
  %v750 = vadd.f32 %v746, %v749
  %vm751 = vweird.f32 %v746
  %v752 = vsel %vm751, %v746, %v750
  %v753 = vmul.f32 %v739, %v752
  %v754 = vmul.f32 %v745, %v752
  %v755 = vmul.f32 %v753, %v753
  %v756 = vsub.f32 %v754, %v755
  %v757 = vmax.f32 %v756, 0.0
  %v758 = vadd.f32 %v757, 1e-05
  %v759 = vrsqrt.pop %v758
  %v760 = vmul.f32 %v759, %v758
  %v761 = vmul.f32 %v760, %v759
  %v762 = vmul.f32 0.5, %v761
  %v763 = vsub.f32 1.5, %v762
  %v764 = vmul.f32 %v759, %v763
  %vm765 = vweird.f32 %v758
  %vm766 = vweird.f32 %v759
  %vm767 = vmor %vm765, %vm766
  %v768 = vsel %vm767, %v759, %v764
  %v769 = vld [vmem:[%s2] sm:$0x1]
  %v770 = vmul.f32 %v769, %v768
  %v771 = vld [vmem:[%s3] sm:$0x1]
  %v772 = vmul.f32 %v753, %v770
  %v773 = vsub.f32 %v771, %v772
  %v775 = vperm.slane %v770, 0
  %v777 = vmul.f32 %v373, %v775
  %v778 = vmul.f32 %v375, %v775
  %v779 = vmul.f32 %v378, %v775
  %v780 = vmul.f32 %v380, %v775
  %v781 = vmul.f32 %v383, %v775
  %v782 = vmul.f32 %v385, %v775
  %v783 = vmul.f32 %v388, %v775
  %v784 = vmul.f32 %v390, %v775
  %v785 = vmul.f32 %v393, %v775
  %v786 = vmul.f32 %v395, %v775
  %v787 = vmul.f32 %v398, %v775
  %v788 = vmul.f32 %v400, %v775
  %v789 = vmul.f32 %v403, %v775
  %v790 = vmul.f32 %v405, %v775
  %v791 = vmul.f32 %v408, %v775
  %v792 = vmul.f32 %v410, %v775
  %v793 = vmul.f32 %v413, %v775
  %v794 = vmul.f32 %v415, %v775
  %v795 = vmul.f32 %v418, %v775
  %v796 = vmul.f32 %v420, %v775
  %v797 = vmul.f32 %v423, %v775
  %v798 = vmul.f32 %v425, %v775
  %v799 = vmul.f32 %v428, %v775
  %v800 = vmul.f32 %v430, %v775
  %v801 = vmul.f32 %v433, %v775
  %v802 = vmul.f32 %v435, %v775
  %v803 = vmul.f32 %v438, %v775
  %v804 = vmul.f32 %v440, %v775
  %v805 = vmul.f32 %v443, %v775
  %v806 = vmul.f32 %v445, %v775
  %v807 = vmul.f32 %v448, %v775
  %v808 = vmul.f32 %v450, %v775
  %v809 = vmul.f32 %v453, %v775
  %v810 = vmul.f32 %v455, %v775
  %v811 = vmul.f32 %v458, %v775
  %v812 = vmul.f32 %v460, %v775
  %v813 = vmul.f32 %v463, %v775
  %v814 = vmul.f32 %v465, %v775
  %v815 = vmul.f32 %v468, %v775
  %v816 = vmul.f32 %v470, %v775
  %v817 = vmul.f32 %v473, %v775
  %v818 = vmul.f32 %v475, %v775
  %v819 = vmul.f32 %v478, %v775
  %v820 = vmul.f32 %v480, %v775
  %v821 = vmul.f32 %v483, %v775
  %v822 = vmul.f32 %v485, %v775
  %v823 = vmul.f32 %v488, %v775
  %v824 = vmul.f32 %v490, %v775
  %v825 = vmul.f32 %v493, %v775
  %v826 = vmul.f32 %v495, %v775
  %v827 = vmul.f32 %v498, %v775
  %v828 = vmul.f32 %v500, %v775
  %v829 = vmul.f32 %v503, %v775
  %v830 = vmul.f32 %v505, %v775
  %v831 = vmul.f32 %v508, %v775
  %v832 = vmul.f32 %v510, %v775
  %v833 = vmul.f32 %v513, %v775
  %v834 = vmul.f32 %v515, %v775
  %v835 = vmul.f32 %v518, %v775
  %v836 = vmul.f32 %v520, %v775
  %v837 = vmul.f32 %v523, %v775
  %v838 = vmul.f32 %v525, %v775
  %v839 = vmul.f32 %v528, %v775
  %v840 = vmul.f32 %v530, %v775
  %v842 = vperm.slane %v773, 0
  %v844 = vadd.f32 %v777, %v842
  %v845 = vadd.f32 %v778, %v842
  %v846 = vadd.f32 %v779, %v842
  %v847 = vadd.f32 %v780, %v842
  %v848 = vadd.f32 %v781, %v842
  %v849 = vadd.f32 %v782, %v842
  %v850 = vadd.f32 %v783, %v842
  %v851 = vadd.f32 %v784, %v842
  %v852 = vadd.f32 %v785, %v842
  %v853 = vadd.f32 %v786, %v842
  %v854 = vadd.f32 %v787, %v842
  %v855 = vadd.f32 %v788, %v842
  %v856 = vadd.f32 %v789, %v842
  %v857 = vadd.f32 %v790, %v842
  %v858 = vadd.f32 %v791, %v842
  %v859 = vadd.f32 %v792, %v842
  %v860 = vadd.f32 %v793, %v842
  %v861 = vadd.f32 %v794, %v842
  %v862 = vadd.f32 %v795, %v842
  %v863 = vadd.f32 %v796, %v842
  %v864 = vadd.f32 %v797, %v842
  %v865 = vadd.f32 %v798, %v842
  %v866 = vadd.f32 %v799, %v842
  %v867 = vadd.f32 %v800, %v842
  %v868 = vadd.f32 %v801, %v842
  %v869 = vadd.f32 %v802, %v842
  %v870 = vadd.f32 %v803, %v842
  %v871 = vadd.f32 %v804, %v842
  %v872 = vadd.f32 %v805, %v842
  %v873 = vadd.f32 %v806, %v842
  %v874 = vadd.f32 %v807, %v842
  %v875 = vadd.f32 %v808, %v842
  %v876 = vadd.f32 %v809, %v842
  %v877 = vadd.f32 %v810, %v842
  %v878 = vadd.f32 %v811, %v842
  %v879 = vadd.f32 %v812, %v842
  %v880 = vadd.f32 %v813, %v842
  %v881 = vadd.f32 %v814, %v842
  %v882 = vadd.f32 %v815, %v842
  %v883 = vadd.f32 %v816, %v842
  %v884 = vadd.f32 %v817, %v842
  %v885 = vadd.f32 %v818, %v842
  %v886 = vadd.f32 %v819, %v842
  %v887 = vadd.f32 %v820, %v842
  %v888 = vadd.f32 %v821, %v842
  %v889 = vadd.f32 %v822, %v842
  %v890 = vadd.f32 %v823, %v842
  %v891 = vadd.f32 %v824, %v842
  %v892 = vadd.f32 %v825, %v842
  %v893 = vadd.f32 %v826, %v842
  %v894 = vadd.f32 %v827, %v842
  %v895 = vadd.f32 %v828, %v842
  %v896 = vadd.f32 %v829, %v842
  %v897 = vadd.f32 %v830, %v842
  %v898 = vadd.f32 %v831, %v842
  %v899 = vadd.f32 %v832, %v842
  %v900 = vadd.f32 %v833, %v842
  %v901 = vadd.f32 %v834, %v842
  %v902 = vadd.f32 %v835, %v842
  %v903 = vadd.f32 %v836, %v842
  %v904 = vadd.f32 %v837, %v842
  %v905 = vadd.f32 %v838, %v842
  %v906 = vadd.f32 %v839, %v842
  %v907 = vadd.f32 %v840, %v842
  %v908 = vmax.f32 %v844, 0.0
  %v909 = vmax.f32 %v845, 0.0
  %v910 = vmax.f32 %v846, 0.0
  %v911 = vmax.f32 %v847, 0.0
  %v912 = vmax.f32 %v848, 0.0
  %v913 = vmax.f32 %v849, 0.0
  %v914 = vmax.f32 %v850, 0.0
  %v915 = vmax.f32 %v851, 0.0
  %v916 = vmax.f32 %v852, 0.0
  %v917 = vmax.f32 %v853, 0.0
  %v918 = vmax.f32 %v854, 0.0
  %v919 = vmax.f32 %v855, 0.0
  %v920 = vmax.f32 %v856, 0.0
  %v921 = vmax.f32 %v857, 0.0
  %v922 = vmax.f32 %v858, 0.0
  %v923 = vmax.f32 %v859, 0.0
  %v924 = vmax.f32 %v860, 0.0
  %v925 = vmax.f32 %v861, 0.0
  %v926 = vmax.f32 %v862, 0.0
  %v927 = vmax.f32 %v863, 0.0
  %v928 = vmax.f32 %v864, 0.0
  %v929 = vmax.f32 %v865, 0.0
  %v930 = vmax.f32 %v866, 0.0
  %v931 = vmax.f32 %v867, 0.0
  %v932 = vmax.f32 %v868, 0.0
  %v933 = vmax.f32 %v869, 0.0
  %v934 = vmax.f32 %v870, 0.0
  %v935 = vmax.f32 %v871, 0.0
  %v936 = vmax.f32 %v872, 0.0
  %v937 = vmax.f32 %v873, 0.0
  %v938 = vmax.f32 %v874, 0.0
  %v939 = vmax.f32 %v875, 0.0
  %v940 = vmax.f32 %v876, 0.0
  %v941 = vmax.f32 %v877, 0.0
  %v942 = vmax.f32 %v878, 0.0
  %v943 = vmax.f32 %v879, 0.0
  %v944 = vmax.f32 %v880, 0.0
  %v945 = vmax.f32 %v881, 0.0
  %v946 = vmax.f32 %v882, 0.0
  %v947 = vmax.f32 %v883, 0.0
  %v948 = vmax.f32 %v884, 0.0
  %v949 = vmax.f32 %v885, 0.0
  %v950 = vmax.f32 %v886, 0.0
  %v951 = vmax.f32 %v887, 0.0
  %v952 = vmax.f32 %v888, 0.0
  %v953 = vmax.f32 %v889, 0.0
  %v954 = vmax.f32 %v890, 0.0
  %v955 = vmax.f32 %v891, 0.0
  %v956 = vmax.f32 %v892, 0.0
  %v957 = vmax.f32 %v893, 0.0
  %v958 = vmax.f32 %v894, 0.0
  %v959 = vmax.f32 %v895, 0.0
  %v960 = vmax.f32 %v896, 0.0
  %v961 = vmax.f32 %v897, 0.0
  %v962 = vmax.f32 %v898, 0.0
  %v963 = vmax.f32 %v899, 0.0
  %v964 = vmax.f32 %v900, 0.0
  %v965 = vmax.f32 %v901, 0.0
  %v966 = vmax.f32 %v902, 0.0
  %v967 = vmax.f32 %v903, 0.0
  %v968 = vmax.f32 %v904, 0.0
  %v969 = vmax.f32 %v905, 0.0
  %v970 = vmax.f32 %v906, 0.0
  %v971 = vmax.f32 %v907, 0.0
  %972 = vst [vmem:[%s4] sm:$0xff] %v908
  %973 = vst [vmem:[%s4 + $0x8] sm:$0xff] %v909
  %974 = vst [vmem:[%s4 + $0x10] sm:$0xff] %v910
  %975 = vst [vmem:[%s4 + $0x18] sm:$0xff] %v911
  %976 = vst [vmem:[%s4 + $0x20] sm:$0xff] %v912
  %977 = vst [vmem:[%s4 + $0x28] sm:$0xff] %v913
  %978 = vst [vmem:[%s4 + $0x30] sm:$0xff] %v914
  %979 = vst [vmem:[%s4 + $0x38] sm:$0xff] %v915
  %980 = vst [vmem:[%s4 + $0x40] sm:$0xff] %v916
  %981 = vst [vmem:[%s4 + $0x48] sm:$0xff] %v917
  %982 = vst [vmem:[%s4 + $0x50] sm:$0xff] %v918
  %983 = vst [vmem:[%s4 + $0x58] sm:$0xff] %v919
  %984 = vst [vmem:[%s4 + $0x60] sm:$0xff] %v920
  %985 = vst [vmem:[%s4 + $0x68] sm:$0xff] %v921
  %986 = vst [vmem:[%s4 + $0x70] sm:$0xff] %v922
  %987 = vst [vmem:[%s4 + $0x78] sm:$0xff] %v923
  %988 = vst [vmem:[%s4 + $0x80] sm:$0xff] %v924
  %989 = vst [vmem:[%s4 + $0x88] sm:$0xff] %v925
  %990 = vst [vmem:[%s4 + $0x90] sm:$0xff] %v926
  %991 = vst [vmem:[%s4 + $0x98] sm:$0xff] %v927
  %992 = vst [vmem:[%s4 + $0xa0] sm:$0xff] %v928
  %993 = vst [vmem:[%s4 + $0xa8] sm:$0xff] %v929
  %994 = vst [vmem:[%s4 + $0xb0] sm:$0xff] %v930
  %995 = vst [vmem:[%s4 + $0xb8] sm:$0xff] %v931
  %996 = vst [vmem:[%s4 + $0xc0] sm:$0xff] %v932
  %997 = vst [vmem:[%s4 + $0xc8] sm:$0xff] %v933
  %998 = vst [vmem:[%s4 + $0xd0] sm:$0xff] %v934
  %999 = vst [vmem:[%s4 + $0xd8] sm:$0xff] %v935
  %1000 = vst [vmem:[%s4 + $0xe0] sm:$0xff] %v936
  %1001 = vst [vmem:[%s4 + $0xe8] sm:$0xff] %v937
  %1002 = vst [vmem:[%s4 + $0xf0] sm:$0xff] %v938
  %1003 = vst [vmem:[%s4 + $0xf8] sm:$0xff] %v939
  %1004 = vst [vmem:[%s4 + $0x100] sm:$0xff] %v940
  %1005 = vst [vmem:[%s4 + $0x108] sm:$0xff] %v941
  %1006 = vst [vmem:[%s4 + $0x110] sm:$0xff] %v942
  %1007 = vst [vmem:[%s4 + $0x118] sm:$0xff] %v943
  %1008 = vst [vmem:[%s4 + $0x120] sm:$0xff] %v944
  %1009 = vst [vmem:[%s4 + $0x128] sm:$0xff] %v945
  %1010 = vst [vmem:[%s4 + $0x130] sm:$0xff] %v946
  %1011 = vst [vmem:[%s4 + $0x138] sm:$0xff] %v947
  %1012 = vst [vmem:[%s4 + $0x140] sm:$0xff] %v948
  %1013 = vst [vmem:[%s4 + $0x148] sm:$0xff] %v949
  %1014 = vst [vmem:[%s4 + $0x150] sm:$0xff] %v950
  %1015 = vst [vmem:[%s4 + $0x158] sm:$0xff] %v951
  %1016 = vst [vmem:[%s4 + $0x160] sm:$0xff] %v952
  %1017 = vst [vmem:[%s4 + $0x168] sm:$0xff] %v953
  %1018 = vst [vmem:[%s4 + $0x170] sm:$0xff] %v954
  %1019 = vst [vmem:[%s4 + $0x178] sm:$0xff] %v955
  %1020 = vst [vmem:[%s4 + $0x180] sm:$0xff] %v956
  %1021 = vst [vmem:[%s4 + $0x188] sm:$0xff] %v957
  %1022 = vst [vmem:[%s4 + $0x190] sm:$0xff] %v958
  %1023 = vst [vmem:[%s4 + $0x198] sm:$0xff] %v959
  %1024 = vst [vmem:[%s4 + $0x1a0] sm:$0xff] %v960
  %1025 = vst [vmem:[%s4 + $0x1a8] sm:$0xff] %v961
  %1026 = vst [vmem:[%s4 + $0x1b0] sm:$0xff] %v962
  %1027 = vst [vmem:[%s4 + $0x1b8] sm:$0xff] %v963
  %1028 = vst [vmem:[%s4 + $0x1c0] sm:$0xff] %v964
  %1029 = vst [vmem:[%s4 + $0x1c8] sm:$0xff] %v965
  %1030 = vst [vmem:[%s4 + $0x1d0] sm:$0xff] %v966
  %1031 = vst [vmem:[%s4 + $0x1d8] sm:$0xff] %v967
  %1032 = vst [vmem:[%s4 + $0x1e0] sm:$0xff] %v968
  %1033 = vst [vmem:[%s4 + $0x1e8] sm:$0xff] %v969
  %1034 = vst [vmem:[%s4 + $0x1f0] sm:$0xff] %v970
  %1035 = vst [vmem:[%s4 + $0x1f8] sm:$0xff] %v971
  // Predicated region
  $region18: #{up_conv_pallas.1} parent=0 // pred_check
    _
  $region19: #{up_conv_pallas.1} parent=0 // pred_check_branch
    %1037 = sbr.rel (0) target = $region21
  $region20: #{up_conv_pallas.1} parent=0 // pred_region
    _
  $region21: #{up_conv_pallas.1} parent=0 // pred_fallthru
    _
  // Predicated region
  $region22: #{up_conv_pallas.1} parent=0 // pred_check
    _
  $region23: #{up_conv_pallas.1} parent=0 // pred_check_branch
    %1039 = sbr.rel (0) target = $region25
  $region24: #{up_conv_pallas.1} parent=0 // pred_region
    _
  $region25: #{up_conv_pallas.1} parent=0 // pred_fallthru
    _

</llo_original>
